<compile_context>
chip_gen: v7x
topology: tpu7x:2x2x1
jax: 0.10.0
libtpu: 0.0.40
codegen_flags: <defaults>
</compile_context>

<pallas_src>
import functools

import jax
import jax.numpy as jnp
from jax.experimental import pallas as pl
from jax.experimental.pallas import tpu as pltpu


def _round_up(x, m):
    return (x + m - 1) // m * m


def _make_recurrent_kernel(T, TB, Hp, H, matmul_dtype, unroll):
    """Recurrent kernel for a (T timesteps) x (TB batch rows) block."""
    inv_h = 1.0 / float(H)

    def kernel(xp_ref, whh_hbm, gamma_ref, beta_ref, out_ref,
               whh_vmem, h_ref, dma_sem):
        # New batch block: zero the carried hidden state and stage W_hh into VMEM
        # exactly once (it is reused for the whole sequence of this block).
        @pl.when(pl.program_id(1) == 0)
        def _():
            h_ref[...] = jnp.zeros_like(h_ref)
            cp = pltpu.make_async_copy(whh_hbm, whh_vmem, dma_sem)
            cp.start()
            cp.wait()

        w_hh = whh_vmem[...]                 # (Hp, Hp), matmul dtype
        gamma = gamma_ref[...]               # (1, Hp) -> implicit row broadcast
        beta = beta_ref[...]                 # (1, Hp)

        def step(t, h):
            inner = (jnp.dot(h.astype(matmul_dtype), w_hh,
                             preferred_element_type=jnp.float32)
                     + xp_ref[t].astype(jnp.float32))          # (TB, Hp) f32
            # One-pass LayerNorm statistics over the true hidden width H.
            # Padded columns of `inner` are exactly zero, so no mask is needed
            # and both reductions issue back-to-back on the XLU.
            s1 = jnp.sum(inner, axis=-1, keepdims=True)
            s2 = jnp.sum(inner * inner, axis=-1, keepdims=True)
            mean = s1 * inv_h
            var = s2 * inv_h - mean * mean
            normed = (inner - mean) * jax.lax.rsqrt(var + 1e-5) * gamma + beta
            h_new = jnp.tanh(normed)
            out_ref[t] = h_new.astype(out_ref.dtype)
            return h_new

        h_ref[...] = jax.lax.fori_loop(0, T, step, h_ref[...], unroll=unroll)

    return kernel


def rnn_forward(x_bsi, params, *, time_block=8, batch_block=None,
                matmul_dtype=jnp.float32, stream_dtype=None):
    """x_bsi: (B, S, I) float32. Returns (B, S, O) matching PyTorch RNN.forward."""
    B, S, I = x_bsi.shape
    H = params["W_hh"].shape[0]
    O = params["W_ho"].shape[1]
    if stream_dtype is None:
        stream_dtype = matmul_dtype          # bf16 path streams x_proj/h_seq in bf16

    # ---- Padded / tiled geometry (vreg: (8,128); MXU M dim: 128/256). ----
    Bp = _round_up(B, 8)
    Hp = _round_up(H, 128)
    T = int(time_block)
    Sp = _round_up(S, T)
    if batch_block is None:
        # Fill the MXU's M dimension where possible; for explicit v7x two-core
        # sharding pass batch_block=Bp//2 so the batch axis has >=2 blocks.
        TB = Bp
        for cand in (256, 128):
            if Bp > cand and Bp % cand == 0:
                TB = cand
                break
    else:
        TB = int(batch_block)
    assert Bp % TB == 0 and TB % 8 == 0, (Bp, TB)

    # ---- (1) Hoisted input projection (one big matmul, biases fused). ----
    # Transpose/pad the *small* (.., I) tensor, not the (.., H) projection.
    x_sbi = jnp.transpose(x_bsi, (1, 0, 2))                        # (S, B, I)
    x_sbi = jnp.pad(x_sbi, ((0, Sp - S), (0, Bp - B), (0, 0)))     # (Sp, Bp, I)

    w_ih = jnp.pad(params["W_ih"], ((0, 0), (0, Hp - H))).astype(matmul_dtype)
    fused_bias = jnp.pad((params["b_ih"] + params["b_hh"]).astype(jnp.float32),
                         ((0, 0), (0, Hp - H)))                    # (1, Hp)

    x_proj = (jnp.dot(x_sbi.reshape(Sp * Bp, I).astype(matmul_dtype), w_ih,
                      preferred_element_type=jnp.float32)
              + fused_bias)                                        # (Sp*Bp, Hp) f32
    x_proj = x_proj.astype(stream_dtype).reshape(Sp, Bp, Hp)       # stream dtype

    # ---- (2) Recurrent-only Pallas kernel. ----
    w_hh = jnp.pad(params["W_hh"], ((0, Hp - H), (0, Hp - H))).astype(matmul_dtype)
    gamma = jnp.pad(params["ln_gamma"], ((0, 0), (0, Hp - H))).astype(jnp.float32)
    beta = jnp.pad(params["ln_beta"], ((0, 0), (0, Hp - H))).astype(jnp.float32)

    stream_bytes = jnp.dtype(stream_dtype).itemsize
    mm_bytes = jnp.dtype(matmul_dtype).itemsize
    vmem_bytes = (2 * T * TB * Hp * stream_bytes      # x_proj in (double-buffered)
                  + 2 * T * TB * Hp * stream_bytes    # h_seq out (double-buffered)
                  + Hp * Hp * mm_bytes                # W_hh staged once in scratch
                  + 4 * Hp * 4                        # gamma/beta
                  + TB * Hp * 4)                      # carried hidden state
    vmem_limit = min(max(int(vmem_bytes * 1.5) + (1 << 20), 8 << 20), 64 << 20)

    unroll = min(T, 8)                                # cap unroll: protect vreg file
    kernel = _make_recurrent_kernel(T, TB, Hp, H, matmul_dtype, unroll)

    h_seq = pl.pallas_call(
        kernel,
        out_shape=jax.ShapeDtypeStruct((Sp, Bp, Hp), stream_dtype),
        grid_spec=pltpu.PrefetchScalarGridSpec(
            num_scalar_prefetch=0,
            grid=(Bp // TB, Sp // T),
            in_specs=[
                pl.BlockSpec((T, TB, Hp), lambda b, s: (s, b, 0)),   # x_proj chunk
                pl.BlockSpec(memory_space=pl.ANY),                   # W_hh (manual stage)
                pl.BlockSpec((1, Hp), lambda b, s: (0, 0)),          # LN gamma
                pl.BlockSpec((1, Hp), lambda b, s: (0, 0)),          # LN beta
            ],
            out_specs=pl.BlockSpec((T, TB, Hp), lambda b, s: (s, b, 0)),
            scratch_shapes=[
                pltpu.VMEM((Hp, Hp), matmul_dtype),   # staged W_hh (single copy)
                pltpu.VMEM((TB, Hp), jnp.float32),    # carried hidden state (f32)
                pltpu.SemaphoreType.DMA(()),          # W_hh copy semaphore
            ],
        ),
        compiler_params=pltpu.CompilerParams(
            # batch blocks are independent (shardable across v7x TCs);
            # the sequence axis is a true recurrence.
            dimension_semantics=("parallel", "arbitrary"),
            vmem_limit_bytes=vmem_limit,
        ),
    )(x_proj, w_hh, gamma, beta)

    # ---- (3) Deferred output projection (one big matmul). ----
    h_seq = h_seq[:S, :B, :H]                                      # drop padding
    y = (jnp.dot(h_seq.reshape(S * B, H).astype(matmul_dtype),
                 params["W_ho"].astype(matmul_dtype),
                 preferred_element_type=jnp.float32)
         + params["b_o"]).reshape(S, B, O)

    # PyTorch: outputs (S, B, O) -> .view(B, S, O)  == a raw reshape, NOT a transpose.
    return y.reshape(B, S, O)


def rnn_reference(x_bsi, params):
    """Pure-JAX f32 reference with identical semantics (for verification)."""
    B, S, I = x_bsi.shape
    H = params["W_hh"].shape[0]
    O = params["W_ho"].shape[1]
    h = jnp.zeros((B, H), jnp.float32)
    outs = []
    for t in range(S):
        x = x_bsi[:, t, :]
        inner = (h @ params["W_hh"] + params["b_hh"]
                 + x @ params["W_ih"] + params["b_ih"])
        mean = jnp.mean(inner, axis=-1, keepdims=True)
        var = jnp.mean((inner - mean) ** 2, axis=-1, keepdims=True)
        normed = (inner - mean) / jnp.sqrt(var + 1e-5)
        normed = normed * params["ln_gamma"] + params["ln_beta"]
        h = jnp.tanh(normed)
        outs.append(h @ params["W_ho"] + params["b_o"])
    out_sbo = jnp.stack(outs, axis=0)          # (S, B, O)
    return out_sbo.reshape(B, S, O)            # same view semantics as torch


def init_params(key, input_size, hidden_size, output_size):
    """Deterministic init mimicking nn.Linear's U(-1/sqrt(fan_in), 1/sqrt(fan_in))."""
    ks = jax.random.split(key, 6)

    def lin(kw, kb, fan_in, fan_out):
        bound = 1.0 / jnp.sqrt(fan_in)
        W = jax.random.uniform(kw, (fan_in, fan_out), jnp.float32, -bound, bound)
        b = jax.random.uniform(kb, (1, fan_out), jnp.float32, -bound, bound)
        return W, b

    W_hh, b_hh = lin(ks[0], ks[1], hidden_size, hidden_size)
    W_ih, b_ih = lin(ks[2], ks[3], input_size, hidden_size)
    W_ho, b_o = lin(ks[4], ks[5], hidden_size, output_size)
    return {
        "W_hh": W_hh, "b_hh": b_hh,
        "W_ih": W_ih, "b_ih": b_ih,
        "W_ho": W_ho, "b_o": b_o,
        "ln_gamma": jnp.ones((1, hidden_size), jnp.float32),
        "ln_beta": jnp.zeros((1, hidden_size), jnp.float32),
    }


if __name__ == "__main__":
    batch, seq = 2, 8
    input_size, hidden_size, output_size = 16, 32, 16

    key = jax.random.PRNGKey(0)
    kx, kp = jax.random.split(key)
    x = jax.random.normal(kx, (batch, seq, input_size), jnp.float32)
    params = init_params(kp, input_size, hidden_size, output_size)

    ref = rnn_reference(x, params)

    # f32 path (matches the f32 reference).
    fwd_f32 = jax.jit(rnn_forward)
    out = jax.block_until_ready(fwd_f32(x, params))
    assert out.shape == (batch, seq, output_size), out.shape
    assert jnp.allclose(out, ref, atol=1e-4, rtol=1e-4), \
        float(jnp.max(jnp.abs(out - ref)))

    # bf16 matmul + bf16 streamed x_proj/h_seq (v5e/v6e/v7x MXU + bandwidth path);
    # f32 accumulation, f32 carried hidden state, f32 LayerNorm/tanh.
    fwd_bf16 = jax.jit(functools.partial(rnn_forward, matmul_dtype=jnp.bfloat16))
    out_bf16 = jax.block_until_ready(fwd_bf16(x, params))
    assert out_bf16.shape == (batch, seq, output_size), out_bf16.shape
    assert float(jnp.max(jnp.abs(out_bf16 - ref))) < 0.1

    print("KERNEL_OK")
</pallas_src>

<mosaic_0001>
module attributes {stable_mosaic.version = 11 : i64} {
  func.func @kernel(%arg0: i32, %arg1: i32, %arg2: memref<8x8x128xf32, #tpu.memory_space<vmem>>, %arg3: memref<128x128xf32, #tpu.memory_space<any>>, %arg4: memref<1x128xf32, #tpu.memory_space<vmem>>, %arg5: memref<1x128xf32, #tpu.memory_space<vmem>>, %arg6: memref<8x8x128xf32, #tpu.memory_space<vmem>>, %arg7: memref<128x128xf32, #tpu.memory_space<vmem>>, %arg8: memref<8x128xf32, #tpu.memory_space<vmem>>, %arg9: memref<!tpu.dma_semaphore, #tpu.memory_space<semaphore_mem>>) attributes {dimension_semantics = [#tpu.dimension_semantics<parallel>, #tpu.dimension_semantics<arbitrary>], iteration_bounds = array<i64: 1, 1>, scalar_prefetch = 0 : i64, scratch_operands = 3 : i64, tpu.core_type = #tpu.core_type<tc>, window_params = [{transform_indices = @transform_0, window_bounds = array<i64: 8, 8, 128>}, {}, {pipeline_mode = #tpu.pipeline_mode<synchronous>, transform_indices = @transform_2, window_bounds = array<i64: 1, 128>}, {pipeline_mode = #tpu.pipeline_mode<synchronous>, transform_indices = @transform_3, window_bounds = array<i64: 1, 128>}, {transform_indices = @transform_4, window_bounds = array<i64: 8, 8, 128>}]} {
    %c0_i32 = arith.constant 0 : i32
    %0 = arith.cmpi eq, %arg1, %c0_i32 : i32
    %1 = arith.extui %0 : i1 to i32
    %c0_i32_0 = arith.constant 0 : i32
    %2 = arith.cmpi ne, %1, %c0_i32_0 : i32
    scf.if %2 {
      %cst_90 = arith.constant 0.000000e+00 : f32
      %264 = vector.broadcast %cst_90 : f32 to vector<8x128xf32>
      %c0_91 = arith.constant 0 : index
      %c0_92 = arith.constant 0 : index
      %265 = vector.load %arg8[%c0_91, %c0_92] : memref<8x128xf32, #tpu.memory_space<vmem>>, vector<8x128xf32>
      tpu.vector_store %arg8[%c0_91, %c0_92], %264 {strides = array<i32>} : memref<8x128xf32, #tpu.memory_space<vmem>>, vector<8x128xf32>,
      tpu.enqueue_dma source(%arg3 : memref<128x128xf32, #tpu.memory_space<any>>) target(%arg7 : memref<128x128xf32, #tpu.memory_space<vmem>>) target_semaphore(%arg9 : memref<!tpu.dma_semaphore, #tpu.memory_space<semaphore_mem>>)
      tpu.wait_dma2 semaphore(%arg9 : memref<!tpu.dma_semaphore, #tpu.memory_space<semaphore_mem>>) src(%arg3 : memref<128x128xf32, #tpu.memory_space<any>>) dst(%arg7 : memref<128x128xf32, #tpu.memory_space<vmem>>)
    } else {
    }
    %c0 = arith.constant 0 : index
    %c0_1 = arith.constant 0 : index
    %3 = vector.load %arg7[%c0, %c0_1] : memref<128x128xf32, #tpu.memory_space<vmem>>, vector<128x128xf32>
    %c0_2 = arith.constant 0 : index
    %c0_3 = arith.constant 0 : index
    %4 = vector.load %arg4[%c0_2, %c0_3] : memref<1x128xf32, #tpu.memory_space<vmem>>, vector<1x128xf32>
    %c0_4 = arith.constant 0 : index
    %c0_5 = arith.constant 0 : index
    %5 = vector.load %arg5[%c0_4, %c0_5] : memref<1x128xf32, #tpu.memory_space<vmem>>, vector<1x128xf32>
    %c0_6 = arith.constant 0 : index
    %c0_7 = arith.constant 0 : index
    %6 = vector.load %arg8[%c0_6, %c0_7] : memref<8x128xf32, #tpu.memory_space<vmem>>, vector<8x128xf32>
    %c0_i32_8 = arith.constant 0 : i32
    %cst = arith.constant dense<0.000000e+00> : vector<8x128xf32>
    %7 = tpu.matmul %6, %3, %cst {dimension_numbers = #tpu.dot_dimension_numbers<[1], [0], [0], [1], [0, 0, 1, 1], [], []>} : vector<8x128xf32>, vector<128x128xf32>, vector<8x128xf32> -> vector<8x128xf32>
    %8 = arith.index_cast %c0_i32_8 : i32 to index
    %c0_9 = arith.constant 0 : index
    %c0_10 = arith.constant 0 : index
    %9 = vector.load %arg2[%8, %c0_9, %c0_10] : memref<8x8x128xf32, #tpu.memory_space<vmem>>, vector<1x8x128xf32>
    %10 = vector.shape_cast %9 : vector<1x8x128xf32> to vector<8x128xf32>
    %11 = arith.addf %7, %10 : vector<8x128xf32>
    %cst_11 = arith.constant dense<0.000000e+00> : vector<8xf32>
    %12 = vector.multi_reduction <add>, %11, %cst_11 [1] : vector<8x128xf32> to vector<8xf32>
    %13 = vector.shape_cast %12 : vector<8xf32> to vector<8x1xf32>
    %14 = arith.mulf %11, %11 : vector<8x128xf32>
    %cst_12 = arith.constant dense<0.000000e+00> : vector<8xf32>
    %15 = vector.multi_reduction <add>, %14, %cst_12 [1] : vector<8x128xf32> to vector<8xf32>
    %16 = vector.shape_cast %15 : vector<8xf32> to vector<8x1xf32>
    %cst_13 = arith.constant 3.125000e-02 : f32
    %17 = vector.broadcast %cst_13 : f32 to vector<8x1xf32>
    %18 = arith.mulf %13, %17 : vector<8x1xf32>
    %cst_14 = arith.constant 3.125000e-02 : f32
    %19 = vector.broadcast %cst_14 : f32 to vector<8x1xf32>
    %20 = arith.mulf %16, %19 : vector<8x1xf32>
    %21 = arith.mulf %18, %18 : vector<8x1xf32>
    %22 = arith.subf %20, %21 : vector<8x1xf32>
    %23 = vector.broadcast %18 : vector<8x1xf32> to vector<8x128xf32>
    %24 = arith.subf %11, %23 : vector<8x128xf32>
    %cst_15 = arith.constant 9.99999974E-6 : f32
    %25 = vector.broadcast %cst_15 : f32 to vector<8x1xf32>
    %26 = arith.addf %22, %25 : vector<8x1xf32>
    %27 = math.rsqrt %26 : vector<8x1xf32>
    %28 = vector.broadcast %27 : vector<8x1xf32> to vector<8x128xf32>
    %29 = arith.mulf %24, %28 : vector<8x128xf32>
    %30 = vector.broadcast %4 : vector<1x128xf32> to vector<8x128xf32>
    %31 = arith.mulf %29, %30 : vector<8x128xf32>
    %32 = vector.broadcast %5 : vector<1x128xf32> to vector<8x128xf32>
    %33 = arith.addf %31, %32 : vector<8x128xf32>
    %34 = math.tanh %33 : vector<8x128xf32>
    %35 = arith.index_cast %c0_i32_8 : i32 to index
    %c0_16 = arith.constant 0 : index
    %c0_17 = arith.constant 0 : index
    %36 = vector.load %arg6[%35, %c0_16, %c0_17] : memref<8x8x128xf32, #tpu.memory_space<vmem>>, vector<1x8x128xf32>
    %37 = vector.shape_cast %36 : vector<1x8x128xf32> to vector<8x128xf32>
    %38 = vector.shape_cast %34 : vector<8x128xf32> to vector<1x8x128xf32>
    tpu.vector_store %arg6[%35, %c0_16, %c0_17], %38 {strides = array<i32>} : memref<8x8x128xf32, #tpu.memory_space<vmem>>, vector<1x8x128xf32>,
    %c1_i32 = arith.constant 1 : i32
    %cst_18 = arith.constant dense<0.000000e+00> : vector<8x128xf32>
    %39 = tpu.matmul %34, %3, %cst_18 {dimension_numbers = #tpu.dot_dimension_numbers<[1], [0], [0], [1], [0, 0, 1, 1], [], []>} : vector<8x128xf32>, vector<128x128xf32>, vector<8x128xf32> -> vector<8x128xf32>
    %40 = arith.index_cast %c1_i32 : i32 to index
    %c0_19 = arith.constant 0 : index
    %c0_20 = arith.constant 0 : index
    %41 = vector.load %arg2[%40, %c0_19, %c0_20] : memref<8x8x128xf32, #tpu.memory_space<vmem>>, vector<1x8x128xf32>
    %42 = vector.shape_cast %41 : vector<1x8x128xf32> to vector<8x128xf32>
    %43 = arith.addf %39, %42 : vector<8x128xf32>
    %cst_21 = arith.constant dense<0.000000e+00> : vector<8xf32>
    %44 = vector.multi_reduction <add>, %43, %cst_21 [1] : vector<8x128xf32> to vector<8xf32>
    %45 = vector.shape_cast %44 : vector<8xf32> to vector<8x1xf32>
    %46 = arith.mulf %43, %43 : vector<8x128xf32>
    %cst_22 = arith.constant dense<0.000000e+00> : vector<8xf32>
    %47 = vector.multi_reduction <add>, %46, %cst_22 [1] : vector<8x128xf32> to vector<8xf32>
    %48 = vector.shape_cast %47 : vector<8xf32> to vector<8x1xf32>
    %cst_23 = arith.constant 3.125000e-02 : f32
    %49 = vector.broadcast %cst_23 : f32 to vector<8x1xf32>
    %50 = arith.mulf %45, %49 : vector<8x1xf32>
    %cst_24 = arith.constant 3.125000e-02 : f32
    %51 = vector.broadcast %cst_24 : f32 to vector<8x1xf32>
    %52 = arith.mulf %48, %51 : vector<8x1xf32>
    %53 = arith.mulf %50, %50 : vector<8x1xf32>
    %54 = arith.subf %52, %53 : vector<8x1xf32>
    %55 = vector.broadcast %50 : vector<8x1xf32> to vector<8x128xf32>
    %56 = arith.subf %43, %55 : vector<8x128xf32>
    %cst_25 = arith.constant 9.99999974E-6 : f32
    %57 = vector.broadcast %cst_25 : f32 to vector<8x1xf32>
    %58 = arith.addf %54, %57 : vector<8x1xf32>
    %59 = math.rsqrt %58 : vector<8x1xf32>
    %60 = vector.broadcast %59 : vector<8x1xf32> to vector<8x128xf32>
    %61 = arith.mulf %56, %60 : vector<8x128xf32>
    %62 = vector.broadcast %4 : vector<1x128xf32> to vector<8x128xf32>
    %63 = arith.mulf %61, %62 : vector<8x128xf32>
    %64 = vector.broadcast %5 : vector<1x128xf32> to vector<8x128xf32>
    %65 = arith.addf %63, %64 : vector<8x128xf32>
    %66 = math.tanh %65 : vector<8x128xf32>
    %67 = arith.index_cast %c1_i32 : i32 to index
    %c0_26 = arith.constant 0 : index
    %c0_27 = arith.constant 0 : index
    %68 = vector.load %arg6[%67, %c0_26, %c0_27] : memref<8x8x128xf32, #tpu.memory_space<vmem>>, vector<1x8x128xf32>
    %69 = vector.shape_cast %68 : vector<1x8x128xf32> to vector<8x128xf32>
    %70 = vector.shape_cast %66 : vector<8x128xf32> to vector<1x8x128xf32>
    tpu.vector_store %arg6[%67, %c0_26, %c0_27], %70 {strides = array<i32>} : memref<8x8x128xf32, #tpu.memory_space<vmem>>, vector<1x8x128xf32>,
    %c2_i32 = arith.constant 2 : i32
    %cst_28 = arith.constant dense<0.000000e+00> : vector<8x128xf32>
    %71 = tpu.matmul %66, %3, %cst_28 {dimension_numbers = #tpu.dot_dimension_numbers<[1], [0], [0], [1], [0, 0, 1, 1], [], []>} : vector<8x128xf32>, vector<128x128xf32>, vector<8x128xf32> -> vector<8x128xf32>
    %72 = arith.index_cast %c2_i32 : i32 to index
    %c0_29 = arith.constant 0 : index
    %c0_30 = arith.constant 0 : index
    %73 = vector.load %arg2[%72, %c0_29, %c0_30] : memref<8x8x128xf32, #tpu.memory_space<vmem>>, vector<1x8x128xf32>
    %74 = vector.shape_cast %73 : vector<1x8x128xf32> to vector<8x128xf32>
    %75 = arith.addf %71, %74 : vector<8x128xf32>
    %cst_31 = arith.constant dense<0.000000e+00> : vector<8xf32>
    %76 = vector.multi_reduction <add>, %75, %cst_31 [1] : vector<8x128xf32> to vector<8xf32>
    %77 = vector.shape_cast %76 : vector<8xf32> to vector<8x1xf32>
    %78 = arith.mulf %75, %75 : vector<8x128xf32>
    %cst_32 = arith.constant dense<0.000000e+00> : vector<8xf32>
    %79 = vector.multi_reduction <add>, %78, %cst_32 [1] : vector<8x128xf32> to vector<8xf32>
    %80 = vector.shape_cast %79 : vector<8xf32> to vector<8x1xf32>
    %cst_33 = arith.constant 3.125000e-02 : f32
    %81 = vector.broadcast %cst_33 : f32 to vector<8x1xf32>
    %82 = arith.mulf %77, %81 : vector<8x1xf32>
    %cst_34 = arith.constant 3.125000e-02 : f32
    %83 = vector.broadcast %cst_34 : f32 to vector<8x1xf32>
    %84 = arith.mulf %80, %83 : vector<8x1xf32>
    %85 = arith.mulf %82, %82 : vector<8x1xf32>
    %86 = arith.subf %84, %85 : vector<8x1xf32>
    %87 = vector.broadcast %82 : vector<8x1xf32> to vector<8x128xf32>
    %88 = arith.subf %75, %87 : vector<8x128xf32>
    %cst_35 = arith.constant 9.99999974E-6 : f32
    %89 = vector.broadcast %cst_35 : f32 to vector<8x1xf32>
    %90 = arith.addf %86, %89 : vector<8x1xf32>
    %91 = math.rsqrt %90 : vector<8x1xf32>
    %92 = vector.broadcast %91 : vector<8x1xf32> to vector<8x128xf32>
    %93 = arith.mulf %88, %92 : vector<8x128xf32>
    %94 = vector.broadcast %4 : vector<1x128xf32> to vector<8x128xf32>
    %95 = arith.mulf %93, %94 : vector<8x128xf32>
    %96 = vector.broadcast %5 : vector<1x128xf32> to vector<8x128xf32>
    %97 = arith.addf %95, %96 : vector<8x128xf32>
    %98 = math.tanh %97 : vector<8x128xf32>
    %99 = arith.index_cast %c2_i32 : i32 to index
    %c0_36 = arith.constant 0 : index
    %c0_37 = arith.constant 0 : index
    %100 = vector.load %arg6[%99, %c0_36, %c0_37] : memref<8x8x128xf32, #tpu.memory_space<vmem>>, vector<1x8x128xf32>
    %101 = vector.shape_cast %100 : vector<1x8x128xf32> to vector<8x128xf32>
    %102 = vector.shape_cast %98 : vector<8x128xf32> to vector<1x8x128xf32>
    tpu.vector_store %arg6[%99, %c0_36, %c0_37], %102 {strides = array<i32>} : memref<8x8x128xf32, #tpu.memory_space<vmem>>, vector<1x8x128xf32>,
    %c3_i32 = arith.constant 3 : i32
    %cst_38 = arith.constant dense<0.000000e+00> : vector<8x128xf32>
    %103 = tpu.matmul %98, %3, %cst_38 {dimension_numbers = #tpu.dot_dimension_numbers<[1], [0], [0], [1], [0, 0, 1, 1], [], []>} : vector<8x128xf32>, vector<128x128xf32>, vector<8x128xf32> -> vector<8x128xf32>
    %104 = arith.index_cast %c3_i32 : i32 to index
    %c0_39 = arith.constant 0 : index
    %c0_40 = arith.constant 0 : index
    %105 = vector.load %arg2[%104, %c0_39, %c0_40] : memref<8x8x128xf32, #tpu.memory_space<vmem>>, vector<1x8x128xf32>
    %106 = vector.shape_cast %105 : vector<1x8x128xf32> to vector<8x128xf32>
    %107 = arith.addf %103, %106 : vector<8x128xf32>
    %cst_41 = arith.constant dense<0.000000e+00> : vector<8xf32>
    %108 = vector.multi_reduction <add>, %107, %cst_41 [1] : vector<8x128xf32> to vector<8xf32>
    %109 = vector.shape_cast %108 : vector<8xf32> to vector<8x1xf32>
    %110 = arith.mulf %107, %107 : vector<8x128xf32>
    %cst_42 = arith.constant dense<0.000000e+00> : vector<8xf32>
    %111 = vector.multi_reduction <add>, %110, %cst_42 [1] : vector<8x128xf32> to vector<8xf32>
    %112 = vector.shape_cast %111 : vector<8xf32> to vector<8x1xf32>
    %cst_43 = arith.constant 3.125000e-02 : f32
    %113 = vector.broadcast %cst_43 : f32 to vector<8x1xf32>
    %114 = arith.mulf %109, %113 : vector<8x1xf32>
    %cst_44 = arith.constant 3.125000e-02 : f32
    %115 = vector.broadcast %cst_44 : f32 to vector<8x1xf32>
    %116 = arith.mulf %112, %115 : vector<8x1xf32>
    %117 = arith.mulf %114, %114 : vector<8x1xf32>
    %118 = arith.subf %116, %117 : vector<8x1xf32>
    %119 = vector.broadcast %114 : vector<8x1xf32> to vector<8x128xf32>
    %120 = arith.subf %107, %119 : vector<8x128xf32>
    %cst_45 = arith.constant 9.99999974E-6 : f32
    %121 = vector.broadcast %cst_45 : f32 to vector<8x1xf32>
    %122 = arith.addf %118, %121 : vector<8x1xf32>
    %123 = math.rsqrt %122 : vector<8x1xf32>
    %124 = vector.broadcast %123 : vector<8x1xf32> to vector<8x128xf32>
    %125 = arith.mulf %120, %124 : vector<8x128xf32>
    %126 = vector.broadcast %4 : vector<1x128xf32> to vector<8x128xf32>
    %127 = arith.mulf %125, %126 : vector<8x128xf32>
    %128 = vector.broadcast %5 : vector<1x128xf32> to vector<8x128xf32>
    %129 = arith.addf %127, %128 : vector<8x128xf32>
    %130 = math.tanh %129 : vector<8x128xf32>
    %131 = arith.index_cast %c3_i32 : i32 to index
    %c0_46 = arith.constant 0 : index
    %c0_47 = arith.constant 0 : index
    %132 = vector.load %arg6[%131, %c0_46, %c0_47] : memref<8x8x128xf32, #tpu.memory_space<vmem>>, vector<1x8x128xf32>
    %133 = vector.shape_cast %132 : vector<1x8x128xf32> to vector<8x128xf32>
    %134 = vector.shape_cast %130 : vector<8x128xf32> to vector<1x8x128xf32>
    tpu.vector_store %arg6[%131, %c0_46, %c0_47], %134 {strides = array<i32>} : memref<8x8x128xf32, #tpu.memory_space<vmem>>, vector<1x8x128xf32>,
    %c4_i32 = arith.constant 4 : i32
    %cst_48 = arith.constant dense<0.000000e+00> : vector<8x128xf32>
    %135 = tpu.matmul %130, %3, %cst_48 {dimension_numbers = #tpu.dot_dimension_numbers<[1], [0], [0], [1], [0, 0, 1, 1], [], []>} : vector<8x128xf32>, vector<128x128xf32>, vector<8x128xf32> -> vector<8x128xf32>
    %136 = arith.index_cast %c4_i32 : i32 to index
    %c0_49 = arith.constant 0 : index
    %c0_50 = arith.constant 0 : index
    %137 = vector.load %arg2[%136, %c0_49, %c0_50] : memref<8x8x128xf32, #tpu.memory_space<vmem>>, vector<1x8x128xf32>
    %138 = vector.shape_cast %137 : vector<1x8x128xf32> to vector<8x128xf32>
    %139 = arith.addf %135, %138 : vector<8x128xf32>
    %cst_51 = arith.constant dense<0.000000e+00> : vector<8xf32>
    %140 = vector.multi_reduction <add>, %139, %cst_51 [1] : vector<8x128xf32> to vector<8xf32>
    %141 = vector.shape_cast %140 : vector<8xf32> to vector<8x1xf32>
    %142 = arith.mulf %139, %139 : vector<8x128xf32>
    %cst_52 = arith.constant dense<0.000000e+00> : vector<8xf32>
    %143 = vector.multi_reduction <add>, %142, %cst_52 [1] : vector<8x128xf32> to vector<8xf32>
    %144 = vector.shape_cast %143 : vector<8xf32> to vector<8x1xf32>
    %cst_53 = arith.constant 3.125000e-02 : f32
    %145 = vector.broadcast %cst_53 : f32 to vector<8x1xf32>
    %146 = arith.mulf %141, %145 : vector<8x1xf32>
    %cst_54 = arith.constant 3.125000e-02 : f32
    %147 = vector.broadcast %cst_54 : f32 to vector<8x1xf32>
    %148 = arith.mulf %144, %147 : vector<8x1xf32>
    %149 = arith.mulf %146, %146 : vector<8x1xf32>
    %150 = arith.subf %148, %149 : vector<8x1xf32>
    %151 = vector.broadcast %146 : vector<8x1xf32> to vector<8x128xf32>
    %152 = arith.subf %139, %151 : vector<8x128xf32>
    %cst_55 = arith.constant 9.99999974E-6 : f32
    %153 = vector.broadcast %cst_55 : f32 to vector<8x1xf32>
    %154 = arith.addf %150, %153 : vector<8x1xf32>
    %155 = math.rsqrt %154 : vector<8x1xf32>
    %156 = vector.broadcast %155 : vector<8x1xf32> to vector<8x128xf32>
    %157 = arith.mulf %152, %156 : vector<8x128xf32>
    %158 = vector.broadcast %4 : vector<1x128xf32> to vector<8x128xf32>
    %159 = arith.mulf %157, %158 : vector<8x128xf32>
    %160 = vector.broadcast %5 : vector<1x128xf32> to vector<8x128xf32>
    %161 = arith.addf %159, %160 : vector<8x128xf32>
    %162 = math.tanh %161 : vector<8x128xf32>
    %163 = arith.index_cast %c4_i32 : i32 to index
    %c0_56 = arith.constant 0 : index
    %c0_57 = arith.constant 0 : index
    %164 = vector.load %arg6[%163, %c0_56, %c0_57] : memref<8x8x128xf32, #tpu.memory_space<vmem>>, vector<1x8x128xf32>
    %165 = vector.shape_cast %164 : vector<1x8x128xf32> to vector<8x128xf32>
    %166 = vector.shape_cast %162 : vector<8x128xf32> to vector<1x8x128xf32>
    tpu.vector_store %arg6[%163, %c0_56, %c0_57], %166 {strides = array<i32>} : memref<8x8x128xf32, #tpu.memory_space<vmem>>, vector<1x8x128xf32>,
    %c5_i32 = arith.constant 5 : i32
    %cst_58 = arith.constant dense<0.000000e+00> : vector<8x128xf32>
    %167 = tpu.matmul %162, %3, %cst_58 {dimension_numbers = #tpu.dot_dimension_numbers<[1], [0], [0], [1], [0, 0, 1, 1], [], []>} : vector<8x128xf32>, vector<128x128xf32>, vector<8x128xf32> -> vector<8x128xf32>
    %168 = arith.index_cast %c5_i32 : i32 to index
    %c0_59 = arith.constant 0 : index
    %c0_60 = arith.constant 0 : index
    %169 = vector.load %arg2[%168, %c0_59, %c0_60] : memref<8x8x128xf32, #tpu.memory_space<vmem>>, vector<1x8x128xf32>
    %170 = vector.shape_cast %169 : vector<1x8x128xf32> to vector<8x128xf32>
    %171 = arith.addf %167, %170 : vector<8x128xf32>
    %cst_61 = arith.constant dense<0.000000e+00> : vector<8xf32>
    %172 = vector.multi_reduction <add>, %171, %cst_61 [1] : vector<8x128xf32> to vector<8xf32>
    %173 = vector.shape_cast %172 : vector<8xf32> to vector<8x1xf32>
    %174 = arith.mulf %171, %171 : vector<8x128xf32>
    %cst_62 = arith.constant dense<0.000000e+00> : vector<8xf32>
    %175 = vector.multi_reduction <add>, %174, %cst_62 [1] : vector<8x128xf32> to vector<8xf32>
    %176 = vector.shape_cast %175 : vector<8xf32> to vector<8x1xf32>
    %cst_63 = arith.constant 3.125000e-02 : f32
    %177 = vector.broadcast %cst_63 : f32 to vector<8x1xf32>
    %178 = arith.mulf %173, %177 : vector<8x1xf32>
    %cst_64 = arith.constant 3.125000e-02 : f32
    %179 = vector.broadcast %cst_64 : f32 to vector<8x1xf32>
    %180 = arith.mulf %176, %179 : vector<8x1xf32>
    %181 = arith.mulf %178, %178 : vector<8x1xf32>
    %182 = arith.subf %180, %181 : vector<8x1xf32>
    %183 = vector.broadcast %178 : vector<8x1xf32> to vector<8x128xf32>
    %184 = arith.subf %171, %183 : vector<8x128xf32>
    %cst_65 = arith.constant 9.99999974E-6 : f32
    %185 = vector.broadcast %cst_65 : f32 to vector<8x1xf32>
    %186 = arith.addf %182, %185 : vector<8x1xf32>
    %187 = math.rsqrt %186 : vector<8x1xf32>
    %188 = vector.broadcast %187 : vector<8x1xf32> to vector<8x128xf32>
    %189 = arith.mulf %184, %188 : vector<8x128xf32>
    %190 = vector.broadcast %4 : vector<1x128xf32> to vector<8x128xf32>
    %191 = arith.mulf %189, %190 : vector<8x128xf32>
    %192 = vector.broadcast %5 : vector<1x128xf32> to vector<8x128xf32>
    %193 = arith.addf %191, %192 : vector<8x128xf32>
    %194 = math.tanh %193 : vector<8x128xf32>
    %195 = arith.index_cast %c5_i32 : i32 to index
    %c0_66 = arith.constant 0 : index
    %c0_67 = arith.constant 0 : index
    %196 = vector.load %arg6[%195, %c0_66, %c0_67] : memref<8x8x128xf32, #tpu.memory_space<vmem>>, vector<1x8x128xf32>
    %197 = vector.shape_cast %196 : vector<1x8x128xf32> to vector<8x128xf32>
    %198 = vector.shape_cast %194 : vector<8x128xf32> to vector<1x8x128xf32>
    tpu.vector_store %arg6[%195, %c0_66, %c0_67], %198 {strides = array<i32>} : memref<8x8x128xf32, #tpu.memory_space<vmem>>, vector<1x8x128xf32>,
    %c6_i32 = arith.constant 6 : i32
    %cst_68 = arith.constant dense<0.000000e+00> : vector<8x128xf32>
    %199 = tpu.matmul %194, %3, %cst_68 {dimension_numbers = #tpu.dot_dimension_numbers<[1], [0], [0], [1], [0, 0, 1, 1], [], []>} : vector<8x128xf32>, vector<128x128xf32>, vector<8x128xf32> -> vector<8x128xf32>
    %200 = arith.index_cast %c6_i32 : i32 to index
    %c0_69 = arith.constant 0 : index
    %c0_70 = arith.constant 0 : index
    %201 = vector.load %arg2[%200, %c0_69, %c0_70] : memref<8x8x128xf32, #tpu.memory_space<vmem>>, vector<1x8x128xf32>
    %202 = vector.shape_cast %201 : vector<1x8x128xf32> to vector<8x128xf32>
    %203 = arith.addf %199, %202 : vector<8x128xf32>
    %cst_71 = arith.constant dense<0.000000e+00> : vector<8xf32>
    %204 = vector.multi_reduction <add>, %203, %cst_71 [1] : vector<8x128xf32> to vector<8xf32>
    %205 = vector.shape_cast %204 : vector<8xf32> to vector<8x1xf32>
    %206 = arith.mulf %203, %203 : vector<8x128xf32>
    %cst_72 = arith.constant dense<0.000000e+00> : vector<8xf32>
    %207 = vector.multi_reduction <add>, %206, %cst_72 [1] : vector<8x128xf32> to vector<8xf32>
    %208 = vector.shape_cast %207 : vector<8xf32> to vector<8x1xf32>
    %cst_73 = arith.constant 3.125000e-02 : f32
    %209 = vector.broadcast %cst_73 : f32 to vector<8x1xf32>
    %210 = arith.mulf %205, %209 : vector<8x1xf32>
    %cst_74 = arith.constant 3.125000e-02 : f32
    %211 = vector.broadcast %cst_74 : f32 to vector<8x1xf32>
    %212 = arith.mulf %208, %211 : vector<8x1xf32>
    %213 = arith.mulf %210, %210 : vector<8x1xf32>
    %214 = arith.subf %212, %213 : vector<8x1xf32>
    %215 = vector.broadcast %210 : vector<8x1xf32> to vector<8x128xf32>
    %216 = arith.subf %203, %215 : vector<8x128xf32>
    %cst_75 = arith.constant 9.99999974E-6 : f32
    %217 = vector.broadcast %cst_75 : f32 to vector<8x1xf32>
    %218 = arith.addf %214, %217 : vector<8x1xf32>
    %219 = math.rsqrt %218 : vector<8x1xf32>
    %220 = vector.broadcast %219 : vector<8x1xf32> to vector<8x128xf32>
    %221 = arith.mulf %216, %220 : vector<8x128xf32>
    %222 = vector.broadcast %4 : vector<1x128xf32> to vector<8x128xf32>
    %223 = arith.mulf %221, %222 : vector<8x128xf32>
    %224 = vector.broadcast %5 : vector<1x128xf32> to vector<8x128xf32>
    %225 = arith.addf %223, %224 : vector<8x128xf32>
    %226 = math.tanh %225 : vector<8x128xf32>
    %227 = arith.index_cast %c6_i32 : i32 to index
    %c0_76 = arith.constant 0 : index
    %c0_77 = arith.constant 0 : index
    %228 = vector.load %arg6[%227, %c0_76, %c0_77] : memref<8x8x128xf32, #tpu.memory_space<vmem>>, vector<1x8x128xf32>
    %229 = vector.shape_cast %228 : vector<1x8x128xf32> to vector<8x128xf32>
    %230 = vector.shape_cast %226 : vector<8x128xf32> to vector<1x8x128xf32>
    tpu.vector_store %arg6[%227, %c0_76, %c0_77], %230 {strides = array<i32>} : memref<8x8x128xf32, #tpu.memory_space<vmem>>, vector<1x8x128xf32>,
    %c7_i32 = arith.constant 7 : i32
    %cst_78 = arith.constant dense<0.000000e+00> : vector<8x128xf32>
    %231 = tpu.matmul %226, %3, %cst_78 {dimension_numbers = #tpu.dot_dimension_numbers<[1], [0], [0], [1], [0, 0, 1, 1], [], []>} : vector<8x128xf32>, vector<128x128xf32>, vector<8x128xf32> -> vector<8x128xf32>
    %232 = arith.index_cast %c7_i32 : i32 to index
    %c0_79 = arith.constant 0 : index
    %c0_80 = arith.constant 0 : index
    %233 = vector.load %arg2[%232, %c0_79, %c0_80] : memref<8x8x128xf32, #tpu.memory_space<vmem>>, vector<1x8x128xf32>
    %234 = vector.shape_cast %233 : vector<1x8x128xf32> to vector<8x128xf32>
    %235 = arith.addf %231, %234 : vector<8x128xf32>
    %cst_81 = arith.constant dense<0.000000e+00> : vector<8xf32>
    %236 = vector.multi_reduction <add>, %235, %cst_81 [1] : vector<8x128xf32> to vector<8xf32>
    %237 = vector.shape_cast %236 : vector<8xf32> to vector<8x1xf32>
    %238 = arith.mulf %235, %235 : vector<8x128xf32>
    %cst_82 = arith.constant dense<0.000000e+00> : vector<8xf32>
    %239 = vector.multi_reduction <add>, %238, %cst_82 [1] : vector<8x128xf32> to vector<8xf32>
    %240 = vector.shape_cast %239 : vector<8xf32> to vector<8x1xf32>
    %cst_83 = arith.constant 3.125000e-02 : f32
    %241 = vector.broadcast %cst_83 : f32 to vector<8x1xf32>
    %242 = arith.mulf %237, %241 : vector<8x1xf32>
    %cst_84 = arith.constant 3.125000e-02 : f32
    %243 = vector.broadcast %cst_84 : f32 to vector<8x1xf32>
    %244 = arith.mulf %240, %243 : vector<8x1xf32>
    %245 = arith.mulf %242, %242 : vector<8x1xf32>
    %246 = arith.subf %244, %245 : vector<8x1xf32>
    %247 = vector.broadcast %242 : vector<8x1xf32> to vector<8x128xf32>
    %248 = arith.subf %235, %247 : vector<8x128xf32>
    %cst_85 = arith.constant 9.99999974E-6 : f32
    %249 = vector.broadcast %cst_85 : f32 to vector<8x1xf32>
    %250 = arith.addf %246, %249 : vector<8x1xf32>
    %251 = math.rsqrt %250 : vector<8x1xf32>
    %252 = vector.broadcast %251 : vector<8x1xf32> to vector<8x128xf32>
    %253 = arith.mulf %248, %252 : vector<8x128xf32>
    %254 = vector.broadcast %4 : vector<1x128xf32> to vector<8x128xf32>
    %255 = arith.mulf %253, %254 : vector<8x128xf32>
    %256 = vector.broadcast %5 : vector<1x128xf32> to vector<8x128xf32>
    %257 = arith.addf %255, %256 : vector<8x128xf32>
    %258 = math.tanh %257 : vector<8x128xf32>
    %259 = arith.index_cast %c7_i32 : i32 to index
    %c0_86 = arith.constant 0 : index
    %c0_87 = arith.constant 0 : index
    %260 = vector.load %arg6[%259, %c0_86, %c0_87] : memref<8x8x128xf32, #tpu.memory_space<vmem>>, vector<1x8x128xf32>
    %261 = vector.shape_cast %260 : vector<1x8x128xf32> to vector<8x128xf32>
    %262 = vector.shape_cast %258 : vector<8x128xf32> to vector<1x8x128xf32>
    tpu.vector_store %arg6[%259, %c0_86, %c0_87], %262 {strides = array<i32>} : memref<8x8x128xf32, #tpu.memory_space<vmem>>, vector<1x8x128xf32>,
    %c8_i32 = arith.constant 8 : i32
    %c0_88 = arith.constant 0 : index
    %c0_89 = arith.constant 0 : index
    %263 = vector.load %arg8[%c0_88, %c0_89] : memref<8x128xf32, #tpu.memory_space<vmem>>, vector<8x128xf32>
    tpu.vector_store %arg8[%c0_88, %c0_89], %258 {strides = array<i32>} : memref<8x128xf32, #tpu.memory_space<vmem>>, vector<8x128xf32>,
    return
  }
  func.func @transform_0(%arg0: i32, %arg1: i32) -> (i32, i32, i32) {
    %c0_i32 = arith.constant 0 : i32
    %c0_i32_0 = arith.constant 0 : i32
    return %arg1, %arg0, %c0_i32 : i32, i32, i32
  }
  func.func @transform_2(%arg0: i32, %arg1: i32) -> (i32, i32) {
    %c0_i32 = arith.constant 0 : i32
    %c0_i32_0 = arith.constant 0 : i32
    %c0_i32_1 = arith.constant 0 : i32
    return %c0_i32, %c0_i32_0 : i32, i32
  }
  func.func @transform_3(%arg0: i32, %arg1: i32) -> (i32, i32) {
    %c0_i32 = arith.constant 0 : i32
    %c0_i32_0 = arith.constant 0 : i32
    %c0_i32_1 = arith.constant 0 : i32
    return %c0_i32, %c0_i32_0 : i32, i32
  }
  func.func @transform_4(%arg0: i32, %arg1: i32) -> (i32, i32, i32) {
    %c0_i32 = arith.constant 0 : i32
    %c0_i32_0 = arith.constant 0 : i32
    return %arg1, %arg0, %c0_i32 : i32, i32, i32
  }
}

</mosaic_0001>

<llo_original>
// kernel: rnn_forward.1
$region0: #{rnn_forward.1}
  #allocation0 [shape = 'u32[]', space=smem, size = 0x4, offset = 0x4, fixed_abs, tag = 'smem constant byte address 0x4 - core index']
  #allocation1 [shape = 'u32[144,128]{1,0:T(1,128)}', space=vmem, size = 0x12000, scoped, tag = 'internal scratch']
  #allocation2 [shape = 'f32[128,128]{1,0:T(8,128)}', space=vmem, size = 0x10000, scoped, tag = 'scratch operand']
  #allocation3 [shape = 'f32[8,128]{1,0:T(8,128)}', space=vmem, size = 0x1000, scoped, tag = 'scratch operand']
  #allocation4 [shape = 's32[1]{0}', space=sflag, size = 0x4, scoped, tag = 'scratch operand']
  #allocation5 [shape = 's32[]', space=sflag, size = 0x4, offset = 0, fixed_abs, tag = 'sflag constant byte address 0x0 - dummy sync flag']
  %s0 = inlined_call_operand.vmem [shape: f32[8,8,128], index: 0, kind: input, shape index: {}]
  %s1 = inlined_call_operand.vmem [shape: f32[128,128], index: 1, kind: input, shape index: {}]
  %s2 = inlined_call_operand.vmem [shape: f32[1,128], index: 2, kind: input, shape index: {}]
  %s3 = inlined_call_operand.vmem [shape: f32[1,128], index: 3, kind: input, shape index: {}]
  %s4 = inlined_call_operand.vmem [shape: f32[8,8,128], index: 4, kind: output, shape index: {}]
  %s5 = sld [smem:[#allocation0]]
  $region60: #{rnn_forward.1} parent=0
    _
  %s7 = ssub.s32 1, %s5
  %s8 = scalar_select 0, %s7, %s5
  // Predicated region
  $region2: #{rnn_forward.1} parent=0 // pred_check
    _
  $region3: #{rnn_forward.1} parent=0 // pred_check_branch
    %10 = sbr.rel (0) target = $region5
  $region4: #{rnn_forward.1} parent=0 // pred_region
    _
  $region5: #{rnn_forward.1} parent=0 // pred_fallthru
    _
  // Predicated region
  $region6: #{rnn_forward.1} parent=0 // pred_check
    _
  $region7: #{rnn_forward.1} parent=0 // pred_check_branch
    %12 = sbr.rel (0) target = $region9
  $region8: #{rnn_forward.1} parent=0 // pred_region
    _
  $region9: #{rnn_forward.1} parent=0 // pred_fallthru
    _
  // Predicated region
  $region10: #{rnn_forward.1} parent=0 // pred_check
    _
  $region11: #{rnn_forward.1} parent=0 // pred_check_branch
    %14 = sbr.rel (0) target = $region13
  $region12: #{rnn_forward.1} parent=0 // pred_region
    _
  $region13: #{rnn_forward.1} parent=0 // pred_fallthru
    _
  %p15 = scmp.eq.s32.totalorder 0, 0
  // Predicated region
  $region14: #{rnn_forward.1} parent=0 // pred_check
    %p16 = pneg %p15
  $region15: #{rnn_forward.1} parent=0 // pred_check_branch
    %18 = sbr.rel (%p16) target = $region17
  $region16: #{rnn_forward.1} parent=0 // pred_region
    %19 = vst [vmem:[#allocation3] sm:$0xff] 0.0
    %p21 = scmp.lt.u32.totalorder 128, 8
    %p22 = pneg %p21
    // Predicated region
    $region18: #{rnn_forward.1} parent=16 // pred_check
      _
    $region19: #{rnn_forward.1} parent=16 // pred_check_branch
      %24 = sbr.rel (%p21) target = $region21
    $region20: #{rnn_forward.1} parent=16 // pred_region
      %s39 = sand.u32 128, 7
      %p40 = scmp.eq.s32.totalorder %s39, 0
      // Predicated region
      $region33: #{rnn_forward.1} parent=20 // pred_check
        %p41 = pneg %p40
      $region34: #{rnn_forward.1} parent=20 // pred_check_branch
        %43 = sbr.rel (%p41) target = $region36
      $region35: #{rnn_forward.1} parent=20 // pred_region
        loop: start=0, step=1, limit=1
        $region37: #{rnn_forward.1} parent=35 // loop_pre_header
          _
        $region38: #{rnn_forward.1} parent=35 // loop_header
          %s45 = sphi 0, %s49
          %p46 = scmp.ge.s32.totalorder %s45, 1
          %s50 = sphi %s1, %s1
          %s51 = sphi [#allocation2], [#allocation2]
        $region39: #{rnn_forward.1} parent=35 // loop_header_branch
          %48 = sbr.rel (%p46) target = $region43
        $region40: #{rnn_forward.1} parent=35 // loop_body
          %v52 = vld [vmem:[%s50] sm:$0xff]
          %53 = vst [vmem:[%s51] sm:$0xff] %v52
          %v54 = vld [vmem:[%s50 + $0x8] sm:$0xff]
          %55 = vst [vmem:[%s51 + $0x8] sm:$0xff] %v54
          %v56 = vld [vmem:[%s50 + $0x10] sm:$0xff]
          %57 = vst [vmem:[%s51 + $0x10] sm:$0xff] %v56
          %v58 = vld [vmem:[%s50 + $0x18] sm:$0xff]
          %59 = vst [vmem:[%s51 + $0x18] sm:$0xff] %v58
          %v60 = vld [vmem:[%s50 + $0x20] sm:$0xff]
          %61 = vst [vmem:[%s51 + $0x20] sm:$0xff] %v60
          %v62 = vld [vmem:[%s50 + $0x28] sm:$0xff]
          %63 = vst [vmem:[%s51 + $0x28] sm:$0xff] %v62
          %v64 = vld [vmem:[%s50 + $0x30] sm:$0xff]
          %65 = vst [vmem:[%s51 + $0x30] sm:$0xff] %v64
          %v66 = vld [vmem:[%s50 + $0x38] sm:$0xff]
          %67 = vst [vmem:[%s51 + $0x38] sm:$0xff] %v66
          %v68 = vld [vmem:[%s50 + $0x40] sm:$0xff]
          %69 = vst [vmem:[%s51 + $0x40] sm:$0xff] %v68
          %v70 = vld [vmem:[%s50 + $0x48] sm:$0xff]
          %71 = vst [vmem:[%s51 + $0x48] sm:$0xff] %v70
          %v72 = vld [vmem:[%s50 + $0x50] sm:$0xff]
          %73 = vst [vmem:[%s51 + $0x50] sm:$0xff] %v72
          %v74 = vld [vmem:[%s50 + $0x58] sm:$0xff]
          %75 = vst [vmem:[%s51 + $0x58] sm:$0xff] %v74
          %v76 = vld [vmem:[%s50 + $0x60] sm:$0xff]
          %77 = vst [vmem:[%s51 + $0x60] sm:$0xff] %v76
          %v78 = vld [vmem:[%s50 + $0x68] sm:$0xff]
          %79 = vst [vmem:[%s51 + $0x68] sm:$0xff] %v78
          %v80 = vld [vmem:[%s50 + $0x70] sm:$0xff]
          %81 = vst [vmem:[%s51 + $0x70] sm:$0xff] %v80
          %v82 = vld [vmem:[%s50 + $0x78] sm:$0xff]
          %83 = vst [vmem:[%s51 + $0x78] sm:$0xff] %v82
        $region41: #{rnn_forward.1} parent=35 // loop_footer
          %s49 = sadd.s32 1, %s45
        $region42: #{rnn_forward.1} parent=35 // loop_footer_branch
          %44 = sbr.rel target = $region38
        $region43: #{rnn_forward.1} parent=35 // loop_exit
          _
      $region36: #{rnn_forward.1} parent=20 // pred_fallthru
        _
      %p84 = pneg %p40
      // Predicated region
      $region44: #{rnn_forward.1} parent=20 // pred_check
        _
      $region45: #{rnn_forward.1} parent=20 // pred_check_branch
        %86 = sbr.rel (%p40) target = $region47
      $region46: #{rnn_forward.1} parent=20 // pred_region
        %s87 = sand.u32 128, 7
      $region47: #{rnn_forward.1} parent=20 // pred_fallthru
        _
    $region21: #{rnn_forward.1} parent=16 // pred_fallthru
      _
    // Predicated region
    $region22: #{rnn_forward.1} parent=16 // pred_check
      %p25 = pneg %p21
    $region23: #{rnn_forward.1} parent=16 // pred_check_branch
      %27 = sbr.rel (%p25) target = $region25
    $region24: #{rnn_forward.1} parent=16 // pred_region
      %s28 = sshllo.u32 0, 128
      loop: start=0, step=1, limit=1
      $region26: #{rnn_forward.1} parent=24 // loop_pre_header
        _
      $region27: #{rnn_forward.1} parent=24 // loop_header
        %s30 = sphi 0, %s34
        %p31 = scmp.ge.s32.totalorder %s30, 1
        %s35 = sphi %s1, %s1
        %s36 = sphi [#allocation2], [#allocation2]
      $region28: #{rnn_forward.1} parent=24 // loop_header_branch
        %33 = sbr.rel (%p31) target = $region32
      $region29: #{rnn_forward.1} parent=24 // loop_body
        %v37 = vld [vmem:[%s35] sm:%s28]
        %38 = vst [vmem:[%s36] sm:%s28] %v37
      $region30: #{rnn_forward.1} parent=24 // loop_footer
        %s34 = sadd.s32 1, %s30
      $region31: #{rnn_forward.1} parent=24 // loop_footer_branch
        %29 = sbr.rel target = $region27
      $region32: #{rnn_forward.1} parent=24 // loop_exit
        _
    $region25: #{rnn_forward.1} parent=16 // pred_fallthru
      _
    // Predicated region
    $region48: #{rnn_forward.1} parent=16 // pred_check
      _
    $region49: #{rnn_forward.1} parent=16 // pred_check_branch
      %90 = sbr.rel (0) target = $region51
    $region50: #{rnn_forward.1} parent=16 // pred_region
      %91 = vsyncadd [#allocation4], 2048
    $region51: #{rnn_forward.1} parent=16 // pred_fallthru
      _
    %s92 = smul.u32 128, 1
    %s93 = sshll.u32 %s92, 4
    %94 = dma.done [#allocation4], %s93
  $region17: #{rnn_forward.1} parent=0 // pred_fallthru
    _
  %v95 = vld [vmem:[#allocation2] sm:$0xff]
  %v96 = vld [vmem:[#allocation2 + $0x8] sm:$0xff]
  %v97 = vld [vmem:[#allocation2 + $0x10] sm:$0xff]
  %v98 = vld [vmem:[#allocation2 + $0x18] sm:$0xff]
  %v99 = vld [vmem:[#allocation2 + $0x20] sm:$0xff]
  %v100 = vld [vmem:[#allocation2 + $0x28] sm:$0xff]
  %v101 = vld [vmem:[#allocation2 + $0x30] sm:$0xff]
  %v102 = vld [vmem:[#allocation2 + $0x38] sm:$0xff]
  %v103 = vld [vmem:[#allocation2 + $0x40] sm:$0xff]
  %v104 = vld [vmem:[#allocation2 + $0x48] sm:$0xff]
  %v105 = vld [vmem:[#allocation2 + $0x50] sm:$0xff]
  %v106 = vld [vmem:[#allocation2 + $0x58] sm:$0xff]
  %v107 = vld [vmem:[#allocation2 + $0x60] sm:$0xff]
  %v108 = vld [vmem:[#allocation2 + $0x68] sm:$0xff]
  %v109 = vld [vmem:[#allocation2 + $0x70] sm:$0xff]
  %v110 = vld [vmem:[#allocation2 + $0x78] sm:$0xff]
  %v111 = vld [vmem:[%s2] sm:$0x1]
  %v112 = vld [vmem:[%s3] sm:$0x1]
  %v113 = vld [vmem:[#allocation3] sm:$0xff]
  %v114 = vld [vmem:[%s0] sm:$0xff]
  %115 = vmatprep.subr.mxu0 0.0
  %116 = vmatpush1.msra.mxu0 %v95
  %117 = vmatprep.subr.mxu0 0.0
  %118 = vmatpush1.msra.mxu0 %v96
  %119 = vmatprep.subr.mxu0 0.0
  %120 = vmatpush1.msra.mxu0 %v97
  %121 = vmatprep.subr.mxu0 0.0
  %122 = vmatpush1.msra.mxu0 %v98
  %123 = vmatprep.subr.mxu0 0.0
  %124 = vmatpush1.msra.mxu0 %v99
  %125 = vmatprep.subr.mxu0 0.0
  %126 = vmatpush1.msra.mxu0 %v100
  %127 = vmatprep.subr.mxu0 0.0
  %128 = vmatpush1.msra.mxu0 %v101
  %129 = vmatprep.subr.mxu0 0.0
  %130 = vmatpush1.msra.mxu0 %v102
  %131 = vmatprep.subr.mxu0 0.0
  %132 = vmatpush1.msra.mxu0 %v103
  %133 = vmatprep.subr.mxu0 0.0
  %134 = vmatpush1.msra.mxu0 %v104
  %135 = vmatprep.subr.mxu0 0.0
  %136 = vmatpush1.msra.mxu0 %v105
  %137 = vmatprep.subr.mxu0 0.0
  %138 = vmatpush1.msra.mxu0 %v106
  %139 = vmatprep.subr.mxu0 0.0
  %140 = vmatpush1.msra.mxu0 %v107
  %141 = vmatprep.subr.mxu0 0.0
  %142 = vmatpush1.msra.mxu0 %v108
  %143 = vmatprep.subr.mxu0 0.0
  %144 = vmatpush1.msra.mxu0 %v109
  %145 = vmatprep.subr.mxu0 0.0
  %146 = vmatpush1.msra.mxu0 %v110
  %147 = vmatprep.subr.mxu0 0.0
  %148 = vmatpush1.msra.mxu0 0.0
  %149 = vmatprep.subr.mxu0 0.0
  %150 = vmatpush1.msra.mxu0 0.0
  %151 = vmatprep.subr.mxu0 0.0
  %152 = vmatpush1.msra.mxu0 0.0
  %153 = vmatprep.subr.mxu0 0.0
  %154 = vmatpush1.msra.mxu0 0.0
  %155 = vmatprep.subr.mxu0 0.0
  %156 = vmatpush1.msra.mxu0 0.0
  %157 = vmatprep.subr.mxu0 0.0
  %158 = vmatpush1.msra.mxu0 0.0
  %159 = vmatprep.subr.mxu0 0.0
  %160 = vmatpush1.msra.mxu0 0.0
  %161 = vmatprep.subr.mxu0 0.0
  %162 = vmatpush1.msra.mxu0 0.0
  %163 = vmatprep.subr.mxu0 0.0
  %164 = vmatpush1.msra.mxu0 0.0
  %165 = vmatprep.subr.mxu0 0.0
  %166 = vmatpush1.msra.mxu0 0.0
  %167 = vmatprep.subr.mxu0 0.0
  %168 = vmatpush1.msra.mxu0 0.0
  %169 = vmatprep.subr.mxu0 0.0
  %170 = vmatpush1.msra.mxu0 0.0
  %171 = vmatprep.subr.mxu0 0.0
  %172 = vmatpush1.msra.mxu0 0.0
  %173 = vmatprep.subr.mxu0 0.0
  %174 = vmatpush1.msra.mxu0 0.0
  %175 = vmatprep.subr.mxu0 0.0
  %176 = vmatpush1.msra.mxu0 0.0
  %177 = vmatprep.subr.mxu0 0.0
  %178 = vmatpush1.msra.mxu0 0.0
  %179 = vmatprep.mubr.f32.mxu0 0.0
  %180 = vmatmul.mubr.f32.gmra.mrb[0].mxu0 %v113
  %v181 = vpop.f32.mrb[0].mxu0
  %v182 = vadd.f32 %v114, %v181
  %v183 = vpop.f32.mrb[0].mxu0
  %184 = vdwg.mxu0
  %185 = vadd.xlane.f32.xlu0 %v182
  %v186 = vpop.xlane.xlu0 %185
  %v187 = vmul.f32 %v182, %v182
  %188 = vadd.xlane.f32.xlu0 %v187
  %v189 = vpop.xlane.xlu0 %188
  %v190 = vmul.f32 %v186, 0.03125
  %v191 = vmul.f32 %v189, 0.03125
  %v192 = vmul.f32 %v190, %v190
  %v193 = vsub.f32 %v191, %v192
  %v194 = vsub.f32 %v182, %v190
  %v195 = vadd.f32 %v193, 1e-05
  %v196 = vrsqrt.pop %v195
  %v197 = vmul.f32 %v194, %v196
  %v199 = vlaneseq
  %v200 = vshrl.u32 %v199, 7
  %v201 = vsub.s32 0, %v200
  %v202 = vrot.slane %v111, %v201
  %v204 = vmul.f32 %v197, %v202
  %v206 = vlaneseq
  %v207 = vshrl.u32 %v206, 7
  %v208 = vsub.s32 0, %v207
  %v209 = vrot.slane %v112, %v208
  %v211 = vadd.f32 %v204, %v209
  %v212 = vtanh.pop %v211
  %213 = vst [vmem:[%s4] sm:$0xff] %v212
  %s214 = scalar_lea.vmem %s0, 8
  %v215 = vld [vmem:[%s214] sm:$0xff]
  %216 = vmatprep.subr.mxu0 0.0
  %217 = vmatpush1.msra.mxu0 %v95
  %218 = vmatprep.subr.mxu0 0.0
  %219 = vmatpush1.msra.mxu0 %v96
  %220 = vmatprep.subr.mxu0 0.0
  %221 = vmatpush1.msra.mxu0 %v97
  %222 = vmatprep.subr.mxu0 0.0
  %223 = vmatpush1.msra.mxu0 %v98
  %224 = vmatprep.subr.mxu0 0.0
  %225 = vmatpush1.msra.mxu0 %v99
  %226 = vmatprep.subr.mxu0 0.0
  %227 = vmatpush1.msra.mxu0 %v100
  %228 = vmatprep.subr.mxu0 0.0
  %229 = vmatpush1.msra.mxu0 %v101
  %230 = vmatprep.subr.mxu0 0.0
  %231 = vmatpush1.msra.mxu0 %v102
  %232 = vmatprep.subr.mxu0 0.0
  %233 = vmatpush1.msra.mxu0 %v103
  %234 = vmatprep.subr.mxu0 0.0
  %235 = vmatpush1.msra.mxu0 %v104
  %236 = vmatprep.subr.mxu0 0.0
  %237 = vmatpush1.msra.mxu0 %v105
  %238 = vmatprep.subr.mxu0 0.0
  %239 = vmatpush1.msra.mxu0 %v106
  %240 = vmatprep.subr.mxu0 0.0
  %241 = vmatpush1.msra.mxu0 %v107
  %242 = vmatprep.subr.mxu0 0.0
  %243 = vmatpush1.msra.mxu0 %v108
  %244 = vmatprep.subr.mxu0 0.0
  %245 = vmatpush1.msra.mxu0 %v109
  %246 = vmatprep.subr.mxu0 0.0
  %247 = vmatpush1.msra.mxu0 %v110
  %248 = vmatprep.subr.mxu0 0.0
  %249 = vmatpush1.msra.mxu0 0.0
  %250 = vmatprep.subr.mxu0 0.0
  %251 = vmatpush1.msra.mxu0 0.0
  %252 = vmatprep.subr.mxu0 0.0
  %253 = vmatpush1.msra.mxu0 0.0
  %254 = vmatprep.subr.mxu0 0.0
  %255 = vmatpush1.msra.mxu0 0.0
  %256 = vmatprep.subr.mxu0 0.0
  %257 = vmatpush1.msra.mxu0 0.0
  %258 = vmatprep.subr.mxu0 0.0
  %259 = vmatpush1.msra.mxu0 0.0
  %260 = vmatprep.subr.mxu0 0.0
  %261 = vmatpush1.msra.mxu0 0.0
  %262 = vmatprep.subr.mxu0 0.0
  %263 = vmatpush1.msra.mxu0 0.0
  %264 = vmatprep.subr.mxu0 0.0
  %265 = vmatpush1.msra.mxu0 0.0
  %266 = vmatprep.subr.mxu0 0.0
  %267 = vmatpush1.msra.mxu0 0.0
  %268 = vmatprep.subr.mxu0 0.0
  %269 = vmatpush1.msra.mxu0 0.0
  %270 = vmatprep.subr.mxu0 0.0
  %271 = vmatpush1.msra.mxu0 0.0
  %272 = vmatprep.subr.mxu0 0.0
  %273 = vmatpush1.msra.mxu0 0.0
  %274 = vmatprep.subr.mxu0 0.0
  %275 = vmatpush1.msra.mxu0 0.0
  %276 = vmatprep.subr.mxu0 0.0
  %277 = vmatpush1.msra.mxu0 0.0
  %278 = vmatprep.subr.mxu0 0.0
  %279 = vmatpush1.msra.mxu0 0.0
  %280 = vmatprep.mubr.f32.mxu0 0.0
  %281 = vmatmul.mubr.f32.gmra.mrb[0].mxu0 %v212
  %v282 = vpop.f32.mrb[0].mxu0
  %v283 = vadd.f32 %v215, %v282
  %v284 = vpop.f32.mrb[0].mxu0
  %285 = vdwg.mxu0
  %286 = vadd.xlane.f32.xlu0 %v283
  %v287 = vpop.xlane.xlu0 %286
  %v288 = vmul.f32 %v283, %v283
  %289 = vadd.xlane.f32.xlu0 %v288
  %v290 = vpop.xlane.xlu0 %289
  %v291 = vmul.f32 %v287, 0.03125
  %v292 = vmul.f32 %v290, 0.03125
  %v293 = vmul.f32 %v291, %v291
  %v294 = vsub.f32 %v292, %v293
  %v295 = vsub.f32 %v283, %v291
  %v296 = vadd.f32 %v294, 1e-05
  %v297 = vrsqrt.pop %v296
  %v298 = vmul.f32 %v295, %v297
  %v299 = vmul.f32 %v298, %v202
  %v300 = vadd.f32 %v299, %v209
  %v301 = vtanh.pop %v300
  %s302 = scalar_lea.vmem %s4, 8
  %303 = vst [vmem:[%s302] sm:$0xff] %v301
  %s304 = scalar_lea.vmem %s0, 16
  %v305 = vld [vmem:[%s304] sm:$0xff]
  %306 = vmatprep.subr.mxu0 0.0
  %307 = vmatpush1.msra.mxu0 %v95
  %308 = vmatprep.subr.mxu0 0.0
  %309 = vmatpush1.msra.mxu0 %v96
  %310 = vmatprep.subr.mxu0 0.0
  %311 = vmatpush1.msra.mxu0 %v97
  %312 = vmatprep.subr.mxu0 0.0
  %313 = vmatpush1.msra.mxu0 %v98
  %314 = vmatprep.subr.mxu0 0.0
  %315 = vmatpush1.msra.mxu0 %v99
  %316 = vmatprep.subr.mxu0 0.0
  %317 = vmatpush1.msra.mxu0 %v100
  %318 = vmatprep.subr.mxu0 0.0
  %319 = vmatpush1.msra.mxu0 %v101
  %320 = vmatprep.subr.mxu0 0.0
  %321 = vmatpush1.msra.mxu0 %v102
  %322 = vmatprep.subr.mxu0 0.0
  %323 = vmatpush1.msra.mxu0 %v103
  %324 = vmatprep.subr.mxu0 0.0
  %325 = vmatpush1.msra.mxu0 %v104
  %326 = vmatprep.subr.mxu0 0.0
  %327 = vmatpush1.msra.mxu0 %v105
  %328 = vmatprep.subr.mxu0 0.0
  %329 = vmatpush1.msra.mxu0 %v106
  %330 = vmatprep.subr.mxu0 0.0
  %331 = vmatpush1.msra.mxu0 %v107
  %332 = vmatprep.subr.mxu0 0.0
  %333 = vmatpush1.msra.mxu0 %v108
  %334 = vmatprep.subr.mxu0 0.0
  %335 = vmatpush1.msra.mxu0 %v109
  %336 = vmatprep.subr.mxu0 0.0
  %337 = vmatpush1.msra.mxu0 %v110
  %338 = vmatprep.subr.mxu0 0.0
  %339 = vmatpush1.msra.mxu0 0.0
  %340 = vmatprep.subr.mxu0 0.0
  %341 = vmatpush1.msra.mxu0 0.0
  %342 = vmatprep.subr.mxu0 0.0
  %343 = vmatpush1.msra.mxu0 0.0
  %344 = vmatprep.subr.mxu0 0.0
  %345 = vmatpush1.msra.mxu0 0.0
  %346 = vmatprep.subr.mxu0 0.0
  %347 = vmatpush1.msra.mxu0 0.0
  %348 = vmatprep.subr.mxu0 0.0
  %349 = vmatpush1.msra.mxu0 0.0
  %350 = vmatprep.subr.mxu0 0.0
  %351 = vmatpush1.msra.mxu0 0.0
  %352 = vmatprep.subr.mxu0 0.0
  %353 = vmatpush1.msra.mxu0 0.0
  %354 = vmatprep.subr.mxu0 0.0
  %355 = vmatpush1.msra.mxu0 0.0
  %356 = vmatprep.subr.mxu0 0.0
  %357 = vmatpush1.msra.mxu0 0.0
  %358 = vmatprep.subr.mxu0 0.0
  %359 = vmatpush1.msra.mxu0 0.0
  %360 = vmatprep.subr.mxu0 0.0
  %361 = vmatpush1.msra.mxu0 0.0
  %362 = vmatprep.subr.mxu0 0.0
  %363 = vmatpush1.msra.mxu0 0.0
  %364 = vmatprep.subr.mxu0 0.0
  %365 = vmatpush1.msra.mxu0 0.0
  %366 = vmatprep.subr.mxu0 0.0
  %367 = vmatpush1.msra.mxu0 0.0
  %368 = vmatprep.subr.mxu0 0.0
  %369 = vmatpush1.msra.mxu0 0.0
  %370 = vmatprep.mubr.f32.mxu0 0.0
  %371 = vmatmul.mubr.f32.gmra.mrb[0].mxu0 %v301
  %v372 = vpop.f32.mrb[0].mxu0
  %v373 = vadd.f32 %v305, %v372
  %v374 = vpop.f32.mrb[0].mxu0
  %375 = vdwg.mxu0
  %376 = vadd.xlane.f32.xlu0 %v373
  %v377 = vpop.xlane.xlu0 %376
  %v378 = vmul.f32 %v373, %v373
  %379 = vadd.xlane.f32.xlu0 %v378
  %v380 = vpop.xlane.xlu0 %379
  %v381 = vmul.f32 %v377, 0.03125
  %v382 = vmul.f32 %v380, 0.03125
  %v383 = vmul.f32 %v381, %v381
  %v384 = vsub.f32 %v382, %v383
  %v385 = vsub.f32 %v373, %v381
  %v386 = vadd.f32 %v384, 1e-05
  %v387 = vrsqrt.pop %v386
  %v388 = vmul.f32 %v385, %v387
  %v389 = vmul.f32 %v388, %v202
  %v390 = vadd.f32 %v389, %v209
  %v391 = vtanh.pop %v390
  %s392 = scalar_lea.vmem %s4, 16
  %393 = vst [vmem:[%s392] sm:$0xff] %v391
  %s394 = scalar_lea.vmem %s0, 24
  %v395 = vld [vmem:[%s394] sm:$0xff]
  %396 = vmatprep.subr.mxu0 0.0
  %397 = vmatpush1.msra.mxu0 %v95
  %398 = vmatprep.subr.mxu0 0.0
  %399 = vmatpush1.msra.mxu0 %v96
  %400 = vmatprep.subr.mxu0 0.0
  %401 = vmatpush1.msra.mxu0 %v97
  %402 = vmatprep.subr.mxu0 0.0
  %403 = vmatpush1.msra.mxu0 %v98
  %404 = vmatprep.subr.mxu0 0.0
  %405 = vmatpush1.msra.mxu0 %v99
  %406 = vmatprep.subr.mxu0 0.0
  %407 = vmatpush1.msra.mxu0 %v100
  %408 = vmatprep.subr.mxu0 0.0
  %409 = vmatpush1.msra.mxu0 %v101
  %410 = vmatprep.subr.mxu0 0.0
  %411 = vmatpush1.msra.mxu0 %v102
  %412 = vmatprep.subr.mxu0 0.0
  %413 = vmatpush1.msra.mxu0 %v103
  %414 = vmatprep.subr.mxu0 0.0
  %415 = vmatpush1.msra.mxu0 %v104
  %416 = vmatprep.subr.mxu0 0.0
  %417 = vmatpush1.msra.mxu0 %v105
  %418 = vmatprep.subr.mxu0 0.0
  %419 = vmatpush1.msra.mxu0 %v106
  %420 = vmatprep.subr.mxu0 0.0
  %421 = vmatpush1.msra.mxu0 %v107
  %422 = vmatprep.subr.mxu0 0.0
  %423 = vmatpush1.msra.mxu0 %v108
  %424 = vmatprep.subr.mxu0 0.0
  %425 = vmatpush1.msra.mxu0 %v109
  %426 = vmatprep.subr.mxu0 0.0
  %427 = vmatpush1.msra.mxu0 %v110
  %428 = vmatprep.subr.mxu0 0.0
  %429 = vmatpush1.msra.mxu0 0.0
  %430 = vmatprep.subr.mxu0 0.0
  %431 = vmatpush1.msra.mxu0 0.0
  %432 = vmatprep.subr.mxu0 0.0
  %433 = vmatpush1.msra.mxu0 0.0
  %434 = vmatprep.subr.mxu0 0.0
  %435 = vmatpush1.msra.mxu0 0.0
  %436 = vmatprep.subr.mxu0 0.0
  %437 = vmatpush1.msra.mxu0 0.0
  %438 = vmatprep.subr.mxu0 0.0
  %439 = vmatpush1.msra.mxu0 0.0
  %440 = vmatprep.subr.mxu0 0.0
  %441 = vmatpush1.msra.mxu0 0.0
  %442 = vmatprep.subr.mxu0 0.0
  %443 = vmatpush1.msra.mxu0 0.0
  %444 = vmatprep.subr.mxu0 0.0
  %445 = vmatpush1.msra.mxu0 0.0
  %446 = vmatprep.subr.mxu0 0.0
  %447 = vmatpush1.msra.mxu0 0.0
  %448 = vmatprep.subr.mxu0 0.0
  %449 = vmatpush1.msra.mxu0 0.0
  %450 = vmatprep.subr.mxu0 0.0
  %451 = vmatpush1.msra.mxu0 0.0
  %452 = vmatprep.subr.mxu0 0.0
  %453 = vmatpush1.msra.mxu0 0.0
  %454 = vmatprep.subr.mxu0 0.0
  %455 = vmatpush1.msra.mxu0 0.0
  %456 = vmatprep.subr.mxu0 0.0
  %457 = vmatpush1.msra.mxu0 0.0
  %458 = vmatprep.subr.mxu0 0.0
  %459 = vmatpush1.msra.mxu0 0.0
  %460 = vmatprep.mubr.f32.mxu0 0.0
  %461 = vmatmul.mubr.f32.gmra.mrb[0].mxu0 %v391
  %v462 = vpop.f32.mrb[0].mxu0
  %v463 = vadd.f32 %v395, %v462
  %v464 = vpop.f32.mrb[0].mxu0
  %465 = vdwg.mxu0
  %466 = vadd.xlane.f32.xlu0 %v463
  %v467 = vpop.xlane.xlu0 %466
  %v468 = vmul.f32 %v463, %v463
  %469 = vadd.xlane.f32.xlu0 %v468
  %v470 = vpop.xlane.xlu0 %469
  %v471 = vmul.f32 %v467, 0.03125
  %v472 = vmul.f32 %v470, 0.03125
  %v473 = vmul.f32 %v471, %v471
  %v474 = vsub.f32 %v472, %v473
  %v475 = vsub.f32 %v463, %v471
  %v476 = vadd.f32 %v474, 1e-05
  %v477 = vrsqrt.pop %v476
  %v478 = vmul.f32 %v475, %v477
  %v479 = vmul.f32 %v478, %v202
  %v480 = vadd.f32 %v479, %v209
  %v481 = vtanh.pop %v480
  %s482 = scalar_lea.vmem %s4, 24
  %483 = vst [vmem:[%s482] sm:$0xff] %v481
  %s484 = scalar_lea.vmem %s0, 32
  %v485 = vld [vmem:[%s484] sm:$0xff]
  %486 = vmatprep.subr.mxu0 0.0
  %487 = vmatpush1.msra.mxu0 %v95
  %488 = vmatprep.subr.mxu0 0.0
  %489 = vmatpush1.msra.mxu0 %v96
  %490 = vmatprep.subr.mxu0 0.0
  %491 = vmatpush1.msra.mxu0 %v97
  %492 = vmatprep.subr.mxu0 0.0
  %493 = vmatpush1.msra.mxu0 %v98
  %494 = vmatprep.subr.mxu0 0.0
  %495 = vmatpush1.msra.mxu0 %v99
  %496 = vmatprep.subr.mxu0 0.0
  %497 = vmatpush1.msra.mxu0 %v100
  %498 = vmatprep.subr.mxu0 0.0
  %499 = vmatpush1.msra.mxu0 %v101
  %500 = vmatprep.subr.mxu0 0.0
  %501 = vmatpush1.msra.mxu0 %v102
  %502 = vmatprep.subr.mxu0 0.0
  %503 = vmatpush1.msra.mxu0 %v103
  %504 = vmatprep.subr.mxu0 0.0
  %505 = vmatpush1.msra.mxu0 %v104
  %506 = vmatprep.subr.mxu0 0.0
  %507 = vmatpush1.msra.mxu0 %v105
  %508 = vmatprep.subr.mxu0 0.0
  %509 = vmatpush1.msra.mxu0 %v106
  %510 = vmatprep.subr.mxu0 0.0
  %511 = vmatpush1.msra.mxu0 %v107
  %512 = vmatprep.subr.mxu0 0.0
  %513 = vmatpush1.msra.mxu0 %v108
  %514 = vmatprep.subr.mxu0 0.0
  %515 = vmatpush1.msra.mxu0 %v109
  %516 = vmatprep.subr.mxu0 0.0
  %517 = vmatpush1.msra.mxu0 %v110
  %518 = vmatprep.subr.mxu0 0.0
  %519 = vmatpush1.msra.mxu0 0.0
  %520 = vmatprep.subr.mxu0 0.0
  %521 = vmatpush1.msra.mxu0 0.0
  %522 = vmatprep.subr.mxu0 0.0
  %523 = vmatpush1.msra.mxu0 0.0
  %524 = vmatprep.subr.mxu0 0.0
  %525 = vmatpush1.msra.mxu0 0.0
  %526 = vmatprep.subr.mxu0 0.0
  %527 = vmatpush1.msra.mxu0 0.0
  %528 = vmatprep.subr.mxu0 0.0
  %529 = vmatpush1.msra.mxu0 0.0
  %530 = vmatprep.subr.mxu0 0.0
  %531 = vmatpush1.msra.mxu0 0.0
  %532 = vmatprep.subr.mxu0 0.0
  %533 = vmatpush1.msra.mxu0 0.0
  %534 = vmatprep.subr.mxu0 0.0
  %535 = vmatpush1.msra.mxu0 0.0
  %536 = vmatprep.subr.mxu0 0.0
  %537 = vmatpush1.msra.mxu0 0.0
  %538 = vmatprep.subr.mxu0 0.0
  %539 = vmatpush1.msra.mxu0 0.0
  %540 = vmatprep.subr.mxu0 0.0
  %541 = vmatpush1.msra.mxu0 0.0
  %542 = vmatprep.subr.mxu0 0.0
  %543 = vmatpush1.msra.mxu0 0.0
  %544 = vmatprep.subr.mxu0 0.0
  %545 = vmatpush1.msra.mxu0 0.0
  %546 = vmatprep.subr.mxu0 0.0
  %547 = vmatpush1.msra.mxu0 0.0
  %548 = vmatprep.subr.mxu0 0.0
  %549 = vmatpush1.msra.mxu0 0.0
  %550 = vmatprep.mubr.f32.mxu0 0.0
  %551 = vmatmul.mubr.f32.gmra.mrb[0].mxu0 %v481
  %v552 = vpop.f32.mrb[0].mxu0
  %v553 = vadd.f32 %v485, %v552
  %v554 = vpop.f32.mrb[0].mxu0
  %555 = vdwg.mxu0
  %556 = vadd.xlane.f32.xlu0 %v553
  %v557 = vpop.xlane.xlu0 %556
  %v558 = vmul.f32 %v553, %v553
  %559 = vadd.xlane.f32.xlu0 %v558
  %v560 = vpop.xlane.xlu0 %559
  %v561 = vmul.f32 %v557, 0.03125
  %v562 = vmul.f32 %v560, 0.03125
  %v563 = vmul.f32 %v561, %v561
  %v564 = vsub.f32 %v562, %v563
  %v565 = vsub.f32 %v553, %v561
  %v566 = vadd.f32 %v564, 1e-05
  %v567 = vrsqrt.pop %v566
  %v568 = vmul.f32 %v565, %v567
  %v569 = vmul.f32 %v568, %v202
  %v570 = vadd.f32 %v569, %v209
  %v571 = vtanh.pop %v570
  %s572 = scalar_lea.vmem %s4, 32
  %573 = vst [vmem:[%s572] sm:$0xff] %v571
  %s574 = scalar_lea.vmem %s0, 40
  %v575 = vld [vmem:[%s574] sm:$0xff]
  %576 = vmatprep.subr.mxu0 0.0
  %577 = vmatpush1.msra.mxu0 %v95
  %578 = vmatprep.subr.mxu0 0.0
  %579 = vmatpush1.msra.mxu0 %v96
  %580 = vmatprep.subr.mxu0 0.0
  %581 = vmatpush1.msra.mxu0 %v97
  %582 = vmatprep.subr.mxu0 0.0
  %583 = vmatpush1.msra.mxu0 %v98
  %584 = vmatprep.subr.mxu0 0.0
  %585 = vmatpush1.msra.mxu0 %v99
  %586 = vmatprep.subr.mxu0 0.0
  %587 = vmatpush1.msra.mxu0 %v100
  %588 = vmatprep.subr.mxu0 0.0
  %589 = vmatpush1.msra.mxu0 %v101
  %590 = vmatprep.subr.mxu0 0.0
  %591 = vmatpush1.msra.mxu0 %v102
  %592 = vmatprep.subr.mxu0 0.0
  %593 = vmatpush1.msra.mxu0 %v103
  %594 = vmatprep.subr.mxu0 0.0
  %595 = vmatpush1.msra.mxu0 %v104
  %596 = vmatprep.subr.mxu0 0.0
  %597 = vmatpush1.msra.mxu0 %v105
  %598 = vmatprep.subr.mxu0 0.0
  %599 = vmatpush1.msra.mxu0 %v106
  %600 = vmatprep.subr.mxu0 0.0
  %601 = vmatpush1.msra.mxu0 %v107
  %602 = vmatprep.subr.mxu0 0.0
  %603 = vmatpush1.msra.mxu0 %v108
  %604 = vmatprep.subr.mxu0 0.0
  %605 = vmatpush1.msra.mxu0 %v109
  %606 = vmatprep.subr.mxu0 0.0
  %607 = vmatpush1.msra.mxu0 %v110
  %608 = vmatprep.subr.mxu0 0.0
  %609 = vmatpush1.msra.mxu0 0.0
  %610 = vmatprep.subr.mxu0 0.0
  %611 = vmatpush1.msra.mxu0 0.0
  %612 = vmatprep.subr.mxu0 0.0
  %613 = vmatpush1.msra.mxu0 0.0
  %614 = vmatprep.subr.mxu0 0.0
  %615 = vmatpush1.msra.mxu0 0.0
  %616 = vmatprep.subr.mxu0 0.0
  %617 = vmatpush1.msra.mxu0 0.0
  %618 = vmatprep.subr.mxu0 0.0
  %619 = vmatpush1.msra.mxu0 0.0
  %620 = vmatprep.subr.mxu0 0.0
  %621 = vmatpush1.msra.mxu0 0.0
  %622 = vmatprep.subr.mxu0 0.0
  %623 = vmatpush1.msra.mxu0 0.0
  %624 = vmatprep.subr.mxu0 0.0
  %625 = vmatpush1.msra.mxu0 0.0
  %626 = vmatprep.subr.mxu0 0.0
  %627 = vmatpush1.msra.mxu0 0.0
  %628 = vmatprep.subr.mxu0 0.0
  %629 = vmatpush1.msra.mxu0 0.0
  %630 = vmatprep.subr.mxu0 0.0
  %631 = vmatpush1.msra.mxu0 0.0
  %632 = vmatprep.subr.mxu0 0.0
  %633 = vmatpush1.msra.mxu0 0.0
  %634 = vmatprep.subr.mxu0 0.0
  %635 = vmatpush1.msra.mxu0 0.0
  %636 = vmatprep.subr.mxu0 0.0
  %637 = vmatpush1.msra.mxu0 0.0
  %638 = vmatprep.subr.mxu0 0.0
  %639 = vmatpush1.msra.mxu0 0.0
  %640 = vmatprep.mubr.f32.mxu0 0.0
  %641 = vmatmul.mubr.f32.gmra.mrb[0].mxu0 %v571
  %v642 = vpop.f32.mrb[0].mxu0
  %v643 = vadd.f32 %v575, %v642
  %v644 = vpop.f32.mrb[0].mxu0
  %645 = vdwg.mxu0
  %646 = vadd.xlane.f32.xlu0 %v643
  %v647 = vpop.xlane.xlu0 %646
  %v648 = vmul.f32 %v643, %v643
  %649 = vadd.xlane.f32.xlu0 %v648
  %v650 = vpop.xlane.xlu0 %649
  %v651 = vmul.f32 %v647, 0.03125
  %v652 = vmul.f32 %v650, 0.03125
  %v653 = vmul.f32 %v651, %v651
  %v654 = vsub.f32 %v652, %v653
  %v655 = vsub.f32 %v643, %v651
  %v656 = vadd.f32 %v654, 1e-05
  %v657 = vrsqrt.pop %v656
  %v658 = vmul.f32 %v655, %v657
  %v659 = vmul.f32 %v658, %v202
  %v660 = vadd.f32 %v659, %v209
  %v661 = vtanh.pop %v660
  %s662 = scalar_lea.vmem %s4, 40
  %663 = vst [vmem:[%s662] sm:$0xff] %v661
  %s664 = scalar_lea.vmem %s0, 48
  %v665 = vld [vmem:[%s664] sm:$0xff]
  %666 = vmatprep.subr.mxu0 0.0
  %667 = vmatpush1.msra.mxu0 %v95
  %668 = vmatprep.subr.mxu0 0.0
  %669 = vmatpush1.msra.mxu0 %v96
  %670 = vmatprep.subr.mxu0 0.0
  %671 = vmatpush1.msra.mxu0 %v97
  %672 = vmatprep.subr.mxu0 0.0
  %673 = vmatpush1.msra.mxu0 %v98
  %674 = vmatprep.subr.mxu0 0.0
  %675 = vmatpush1.msra.mxu0 %v99
  %676 = vmatprep.subr.mxu0 0.0
  %677 = vmatpush1.msra.mxu0 %v100
  %678 = vmatprep.subr.mxu0 0.0
  %679 = vmatpush1.msra.mxu0 %v101
  %680 = vmatprep.subr.mxu0 0.0
  %681 = vmatpush1.msra.mxu0 %v102
  %682 = vmatprep.subr.mxu0 0.0
  %683 = vmatpush1.msra.mxu0 %v103
  %684 = vmatprep.subr.mxu0 0.0
  %685 = vmatpush1.msra.mxu0 %v104
  %686 = vmatprep.subr.mxu0 0.0
  %687 = vmatpush1.msra.mxu0 %v105
  %688 = vmatprep.subr.mxu0 0.0
  %689 = vmatpush1.msra.mxu0 %v106
  %690 = vmatprep.subr.mxu0 0.0
  %691 = vmatpush1.msra.mxu0 %v107
  %692 = vmatprep.subr.mxu0 0.0
  %693 = vmatpush1.msra.mxu0 %v108
  %694 = vmatprep.subr.mxu0 0.0
  %695 = vmatpush1.msra.mxu0 %v109
  %696 = vmatprep.subr.mxu0 0.0
  %697 = vmatpush1.msra.mxu0 %v110
  %698 = vmatprep.subr.mxu0 0.0
  %699 = vmatpush1.msra.mxu0 0.0
  %700 = vmatprep.subr.mxu0 0.0
  %701 = vmatpush1.msra.mxu0 0.0
  %702 = vmatprep.subr.mxu0 0.0
  %703 = vmatpush1.msra.mxu0 0.0
  %704 = vmatprep.subr.mxu0 0.0
  %705 = vmatpush1.msra.mxu0 0.0
  %706 = vmatprep.subr.mxu0 0.0
  %707 = vmatpush1.msra.mxu0 0.0
  %708 = vmatprep.subr.mxu0 0.0
  %709 = vmatpush1.msra.mxu0 0.0
  %710 = vmatprep.subr.mxu0 0.0
  %711 = vmatpush1.msra.mxu0 0.0
  %712 = vmatprep.subr.mxu0 0.0
  %713 = vmatpush1.msra.mxu0 0.0
  %714 = vmatprep.subr.mxu0 0.0
  %715 = vmatpush1.msra.mxu0 0.0
  %716 = vmatprep.subr.mxu0 0.0
  %717 = vmatpush1.msra.mxu0 0.0
  %718 = vmatprep.subr.mxu0 0.0
  %719 = vmatpush1.msra.mxu0 0.0
  %720 = vmatprep.subr.mxu0 0.0
  %721 = vmatpush1.msra.mxu0 0.0
  %722 = vmatprep.subr.mxu0 0.0
  %723 = vmatpush1.msra.mxu0 0.0
  %724 = vmatprep.subr.mxu0 0.0
  %725 = vmatpush1.msra.mxu0 0.0
  %726 = vmatprep.subr.mxu0 0.0
  %727 = vmatpush1.msra.mxu0 0.0
  %728 = vmatprep.subr.mxu0 0.0
  %729 = vmatpush1.msra.mxu0 0.0
  %730 = vmatprep.mubr.f32.mxu0 0.0
  %731 = vmatmul.mubr.f32.gmra.mrb[0].mxu0 %v661
  %v732 = vpop.f32.mrb[0].mxu0
  %v733 = vadd.f32 %v665, %v732
  %v734 = vpop.f32.mrb[0].mxu0
  %735 = vdwg.mxu0
  %736 = vadd.xlane.f32.xlu0 %v733
  %v737 = vpop.xlane.xlu0 %736
  %v738 = vmul.f32 %v733, %v733
  %739 = vadd.xlane.f32.xlu0 %v738
  %v740 = vpop.xlane.xlu0 %739
  %v741 = vmul.f32 %v737, 0.03125
  %v742 = vmul.f32 %v740, 0.03125
  %v743 = vmul.f32 %v741, %v741
  %v744 = vsub.f32 %v742, %v743
  %v745 = vsub.f32 %v733, %v741
  %v746 = vadd.f32 %v744, 1e-05
  %v747 = vrsqrt.pop %v746
  %v748 = vmul.f32 %v745, %v747
  %v749 = vmul.f32 %v748, %v202
  %v750 = vadd.f32 %v749, %v209
  %v751 = vtanh.pop %v750
  %s752 = scalar_lea.vmem %s4, 48
  %753 = vst [vmem:[%s752] sm:$0xff] %v751
  %s754 = scalar_lea.vmem %s0, 56
  %v755 = vld [vmem:[%s754] sm:$0xff]
  %756 = vmatprep.subr.mxu0 0.0
  %757 = vmatpush1.msra.mxu0 %v95
  %758 = vmatprep.subr.mxu0 0.0
  %759 = vmatpush1.msra.mxu0 %v96
  %760 = vmatprep.subr.mxu0 0.0
  %761 = vmatpush1.msra.mxu0 %v97
  %762 = vmatprep.subr.mxu0 0.0
  %763 = vmatpush1.msra.mxu0 %v98
  %764 = vmatprep.subr.mxu0 0.0
  %765 = vmatpush1.msra.mxu0 %v99
  %766 = vmatprep.subr.mxu0 0.0
  %767 = vmatpush1.msra.mxu0 %v100
  %768 = vmatprep.subr.mxu0 0.0
  %769 = vmatpush1.msra.mxu0 %v101
  %770 = vmatprep.subr.mxu0 0.0
  %771 = vmatpush1.msra.mxu0 %v102
  %772 = vmatprep.subr.mxu0 0.0
  %773 = vmatpush1.msra.mxu0 %v103
  %774 = vmatprep.subr.mxu0 0.0
  %775 = vmatpush1.msra.mxu0 %v104
  %776 = vmatprep.subr.mxu0 0.0
  %777 = vmatpush1.msra.mxu0 %v105
  %778 = vmatprep.subr.mxu0 0.0
  %779 = vmatpush1.msra.mxu0 %v106
  %780 = vmatprep.subr.mxu0 0.0
  %781 = vmatpush1.msra.mxu0 %v107
  %782 = vmatprep.subr.mxu0 0.0
  %783 = vmatpush1.msra.mxu0 %v108
  %784 = vmatprep.subr.mxu0 0.0
  %785 = vmatpush1.msra.mxu0 %v109
  %786 = vmatprep.subr.mxu0 0.0
  %787 = vmatpush1.msra.mxu0 %v110
  %788 = vmatprep.subr.mxu0 0.0
  %789 = vmatpush1.msra.mxu0 0.0
  %790 = vmatprep.subr.mxu0 0.0
  %791 = vmatpush1.msra.mxu0 0.0
  %792 = vmatprep.subr.mxu0 0.0
  %793 = vmatpush1.msra.mxu0 0.0
  %794 = vmatprep.subr.mxu0 0.0
  %795 = vmatpush1.msra.mxu0 0.0
  %796 = vmatprep.subr.mxu0 0.0
  %797 = vmatpush1.msra.mxu0 0.0
  %798 = vmatprep.subr.mxu0 0.0
  %799 = vmatpush1.msra.mxu0 0.0
  %800 = vmatprep.subr.mxu0 0.0
  %801 = vmatpush1.msra.mxu0 0.0
  %802 = vmatprep.subr.mxu0 0.0
  %803 = vmatpush1.msra.mxu0 0.0
  %804 = vmatprep.subr.mxu0 0.0
  %805 = vmatpush1.msra.mxu0 0.0
  %806 = vmatprep.subr.mxu0 0.0
  %807 = vmatpush1.msra.mxu0 0.0
  %808 = vmatprep.subr.mxu0 0.0
  %809 = vmatpush1.msra.mxu0 0.0
  %810 = vmatprep.subr.mxu0 0.0
  %811 = vmatpush1.msra.mxu0 0.0
  %812 = vmatprep.subr.mxu0 0.0
  %813 = vmatpush1.msra.mxu0 0.0
  %814 = vmatprep.subr.mxu0 0.0
  %815 = vmatpush1.msra.mxu0 0.0
  %816 = vmatprep.subr.mxu0 0.0
  %817 = vmatpush1.msra.mxu0 0.0
  %818 = vmatprep.subr.mxu0 0.0
  %819 = vmatpush1.msra.mxu0 0.0
  %820 = vmatprep.mubr.f32.mxu0 0.0
  %821 = vmatmul.mubr.f32.gmra.mrb[0].mxu0 %v751
  %v822 = vpop.f32.mrb[0].mxu0
  %v823 = vadd.f32 %v755, %v822
  %v824 = vpop.f32.mrb[0].mxu0
  %825 = vdwg.mxu0
  %826 = vadd.xlane.f32.xlu0 %v823
  %v827 = vpop.xlane.xlu0 %826
  %v828 = vmul.f32 %v823, %v823
  %829 = vadd.xlane.f32.xlu0 %v828
  %v830 = vpop.xlane.xlu0 %829
  %v831 = vmul.f32 %v827, 0.03125
  %v832 = vmul.f32 %v830, 0.03125
  %v833 = vmul.f32 %v831, %v831
  %v834 = vsub.f32 %v832, %v833
  %v835 = vsub.f32 %v823, %v831
  %v836 = vadd.f32 %v834, 1e-05
  %v837 = vrsqrt.pop %v836
  %v838 = vmul.f32 %v835, %v837
  %v839 = vmul.f32 %v838, %v202
  %v840 = vadd.f32 %v839, %v209
  %v841 = vtanh.pop %v840
  %s842 = scalar_lea.vmem %s4, 56
  %843 = vst [vmem:[%s842] sm:$0xff] %v841
  %844 = vst [vmem:[#allocation3] sm:$0xff] %v841
  // Predicated region
  $region52: #{rnn_forward.1} parent=0 // pred_check
    _
  $region53: #{rnn_forward.1} parent=0 // pred_check_branch
    %846 = sbr.rel (0) target = $region55
  $region54: #{rnn_forward.1} parent=0 // pred_region
    _
  $region55: #{rnn_forward.1} parent=0 // pred_fallthru
    _
  // Predicated region
  $region56: #{rnn_forward.1} parent=0 // pred_check
    _
  $region57: #{rnn_forward.1} parent=0 // pred_check_branch
    %848 = sbr.rel (0) target = $region59
  $region58: #{rnn_forward.1} parent=0 // pred_region
    _
  $region59: #{rnn_forward.1} parent=0 // pred_fallthru
    _
  %849 = vsyncmov [#allocation4]
  %s850 = vpop.sfrf %849
  %p851 = scmp.eq.s32.totalorder %s850, 0
  %p852 = pneg %p851
  %854 = shalt.err (%p852)

</llo_original>
